<compile_context>
chip_gen: v7x
topology: tpu7x:2x2x1
jax: 0.10.0
libtpu: 0.0.40
codegen_flags: <defaults>
</compile_context>

<pallas_src>
import jax
import jax.numpy as jnp
from jax.experimental import pallas as pl
from jax.experimental.pallas import tpu as pltpu  # noqa: F401

H1 = 256
H2 = 128
OUT_PAD = 128  # true output width is 1; store a lane-dense 128-wide slab


# ------------------------------- kernel ------------------------------------

def qnet_fused_kernel(state_ref, action_ref, w1s_ref, w1a_ref, b1_ref,
                      w2_ref, b2_ref, w3_ref, b3_ref, o_ref):
    """Both Q heads, back-to-back, in one invocation (no grid).

    Per head h:
        h1 = relu(state @ W1s[h] + action * w1a[h] + b1[h])
        h2 = relu(h1 @ W2[h] + b2[h])
        q  = sum_lanes(h2 * w3_row[h]) + b3[h]        (VPU mult + XLU reduce)
    """
    state = state_ref[...].astype(jnp.bfloat16)      # (batch, state_size)
    action = action_ref[...]                         # (batch, 1) f32
    out_block = o_ref.shape[1:]                      # (batch, OUT_PAD)

    for h in range(2):                               # static unroll over heads
        h1 = jnp.dot(state, w1s_ref[h], preferred_element_type=jnp.float32)
        h1 = h1 + action * w1a_ref[h].astype(jnp.float32) + b1_ref[h]
        h1 = jnp.maximum(h1, 0.0)

        h2 = jnp.dot(h1.astype(jnp.bfloat16), w2_ref[h],
                     preferred_element_type=jnp.float32)
        h2 = jnp.maximum(h2 + b2_ref[h], 0.0)

        q = jnp.sum(h2 * w3_ref[h].astype(jnp.float32), axis=-1, keepdims=True)
        q = q + b3_ref[h]                            # (batch, 1)
        o_ref[h] = jnp.broadcast_to(q, out_block)    # lane-dense, unmasked


def _fused_mlp(state, action, w1s, w1a, b1, w2, b2, w3, b3):
    batch, state_size = state.shape
    flops = 2 * 2 * batch * (state_size * H1 + H1 * H2 + H2)
    in_bytes = sum(int(a.size) * a.dtype.itemsize
                   for a in (state, action, w1s, w1a, b1, w2, b2, w3, b3))
    out_bytes = 2 * batch * OUT_PAD * 4
    return pl.pallas_call(
        qnet_fused_kernel,
        out_shape=jax.ShapeDtypeStruct((2, batch, OUT_PAD), jnp.float32),
        cost_estimate=pl.CostEstimate(
            flops=flops, transcendentals=0,
            bytes_accessed=in_bytes + out_bytes),
    )(state, action, w1s, w1a, b1, w2, b2, w3, b3)


# ----------------------------- parameters ----------------------------------

def init_linear(key, fan_in, fan_out):
    """Deterministic init mimicking torch.nn.Linear (uniform +-1/sqrt(fan_in))."""
    kw, kb = jax.random.split(key)
    bound = 1.0 / jnp.sqrt(jnp.float32(fan_in))
    w = jax.random.uniform(kw, (fan_in, fan_out), jnp.float32, -bound, bound)
    b = jax.random.uniform(kb, (fan_out,), jnp.float32, -bound, bound)
    return w, b


def make_qnetwork_params(key, state_size):
    """Two identical-shape MLP stacks q1, q2: (state_size+1)->256->128->1."""
    in_dim = state_size + 1
    keys = jax.random.split(key, 6)
    q1 = (init_linear(keys[0], in_dim, H1),
          init_linear(keys[1], H1, H2),
          init_linear(keys[2], H2, 1))
    q2 = (init_linear(keys[3], in_dim, H1),
          init_linear(keys[4], H1, H2),
          init_linear(keys[5], H2, 1))
    return q1, q2


def prep_qnetwork_params(q1_params, q2_params):
    """One-time repack of both heads (hoisted out of the forward path).

    W1 is split into its state rows / action row; matmul weights are cast to
    bf16 (f32 accumulation is kept in the kernel); w3 is stored as a row
    vector for the VPU-mult + XLU-reduce final layer.
    """
    def pack(params):
        (w1, b1), (w2, b2), (w3, b3) = params
        return (w1[:-1, :].astype(jnp.bfloat16),          # (state_size, H1)
                w1[-1:, :].astype(jnp.bfloat16),           # (1, H1) action row
                b1.reshape(1, H1).astype(jnp.float32),
                w2.astype(jnp.bfloat16),                   # (H1, H2)
                b2.reshape(1, H2).astype(jnp.float32),
                w3.reshape(1, H2).astype(jnp.bfloat16),    # (1, H2) row vector
                b3.reshape(1, 1).astype(jnp.float32))

    p1, p2 = pack(q1_params), pack(q2_params)
    return tuple(jnp.stack([a, b], axis=0) for a, b in zip(p1, p2))
    # shapes: w1s (2,S,256) bf16, w1a (2,1,256) bf16, b1 (2,1,256) f32,
    #         w2 (2,256,128) bf16, b2 (2,1,128) f32,
    #         w3 (2,1,128) bf16,   b3 (2,1,1) f32


# ------------------------------ forward -------------------------------------

@jax.jit
def qnetwork_forward(state, action, packed_params):
    """Equivalent of QNetwork.forward(state, action) -> (q1, q2)."""
    w1s, w1a, b1, w2, b2, w3, b3 = packed_params
    state = state.astype(jnp.float32)
    action = action.astype(jnp.float32)
    y = _fused_mlp(state, action, w1s, w1a, b1, w2, b2, w3, b3)  # (2,B,128)
    return y[0, :, :1], y[1, :, :1]


def qnetwork_reference(state, action, q1_params, q2_params):
    """Pure-JAX f32 reference matching the PyTorch module."""
    x = jnp.concatenate([state, action], axis=1).astype(jnp.float32)

    def mlp(params, x):
        (w1, b1), (w2, b2), (w3, b3) = params
        h = jnp.maximum(x @ w1 + b1, 0.0)
        h = jnp.maximum(h @ w2 + b2, 0.0)
        return h @ w3 + b3

    return mlp(q1_params, x), mlp(q2_params, x)


if __name__ == "__main__":
    state_size = 16
    batch = 2

    key = jax.random.PRNGKey(0)
    k_params, k_state, k_action = jax.random.split(key, 3)

    q1_params, q2_params = make_qnetwork_params(k_params, state_size)
    packed = prep_qnetwork_params(q1_params, q2_params)

    state = jax.random.normal(k_state, (batch, state_size), jnp.float32)
    action = jax.random.normal(k_action, (batch, 1), jnp.float32)

    q1, q2 = qnetwork_forward(state, action, packed)
    q1, q2 = jax.block_until_ready((q1, q2))

    r1, r2 = qnetwork_reference(state, action, q1_params, q2_params)
    assert q1.shape == (batch, 1) and q2.shape == (batch, 1)
    # Weights are stored in bf16 (f32 accumulate), so compare with a tolerance
    # that covers bf16 quantization (~0.4% relative per weight).
    assert jnp.allclose(q1, r1, atol=5e-2, rtol=5e-2), (q1, r1)
    assert jnp.allclose(q2, r2, atol=5e-2, rtol=5e-2), (q2, r2)

    print("KERNEL_OK")
</pallas_src>

<mosaic_0001>
module attributes {stable_mosaic.version = 11 : i64} {
  func.func @qnet_fused_kernel(%arg0: memref<2x16xf32, #tpu.memory_space<vmem>>, %arg1: memref<2x1xf32, #tpu.memory_space<vmem>>, %arg2: memref<2x16x256xbf16, #tpu.memory_space<vmem>>, %arg3: memref<2x1x256xbf16, #tpu.memory_space<vmem>>, %arg4: memref<2x1x256xf32, #tpu.memory_space<vmem>>, %arg5: memref<2x256x128xbf16, #tpu.memory_space<vmem>>, %arg6: memref<2x1x128xf32, #tpu.memory_space<vmem>>, %arg7: memref<2x1x128xbf16, #tpu.memory_space<vmem>>, %arg8: memref<2x1x1xf32, #tpu.memory_space<vmem>>, %arg9: memref<2x2x128xf32, #tpu.memory_space<vmem>>) attributes {dimension_semantics = [], scalar_prefetch = 0 : i64, scratch_operands = 0 : i64, tpu.core_type = #tpu.core_type<tc>} {
    %c0 = arith.constant 0 : index
    %c0_0 = arith.constant 0 : index
    %0 = vector.load %arg0[%c0, %c0_0] : memref<2x16xf32, #tpu.memory_space<vmem>>, vector<2x16xf32>
    %1 = arith.truncf %0 : vector<2x16xf32> to vector<2x16xbf16>
    %c0_1 = arith.constant 0 : index
    %c0_2 = arith.constant 0 : index
    %2 = vector.load %arg1[%c0_1, %c0_2] : memref<2x1xf32, #tpu.memory_space<vmem>>, vector<2x1xf32>
    %c0_3 = arith.constant 0 : index
    %c0_4 = arith.constant 0 : index
    %c0_5 = arith.constant 0 : index
    %3 = vector.load %arg2[%c0_3, %c0_4, %c0_5] : memref<2x16x256xbf16, #tpu.memory_space<vmem>>, vector<1x16x256xbf16>
    %4 = vector.shape_cast %3 : vector<1x16x256xbf16> to vector<16x256xbf16>
    %cst = arith.constant dense<0.000000e+00> : vector<2x256xf32>
    %5 = tpu.matmul %1, %4, %cst {dimension_numbers = #tpu.dot_dimension_numbers<[1], [0], [0], [1], [0, 0, 1, 1], [], []>} : vector<2x16xbf16>, vector<16x256xbf16>, vector<2x256xf32> -> vector<2x256xf32>
    %c0_6 = arith.constant 0 : index
    %c0_7 = arith.constant 0 : index
    %c0_8 = arith.constant 0 : index
    %6 = vector.load %arg3[%c0_6, %c0_7, %c0_8] : memref<2x1x256xbf16, #tpu.memory_space<vmem>>, vector<1x1x256xbf16>
    %7 = vector.shape_cast %6 : vector<1x1x256xbf16> to vector<1x256xbf16>
    %8 = arith.extf %7 : vector<1x256xbf16> to vector<1x256xf32>
    %9 = vector.broadcast %2 : vector<2x1xf32> to vector<2x256xf32>
    %10 = vector.broadcast %8 : vector<1x256xf32> to vector<2x256xf32>
    %11 = arith.mulf %9, %10 : vector<2x256xf32>
    %12 = arith.addf %5, %11 : vector<2x256xf32>
    %c0_9 = arith.constant 0 : index
    %c0_10 = arith.constant 0 : index
    %c0_11 = arith.constant 0 : index
    %13 = vector.load %arg4[%c0_9, %c0_10, %c0_11] : memref<2x1x256xf32, #tpu.memory_space<vmem>>, vector<1x1x256xf32>
    %14 = vector.shape_cast %13 : vector<1x1x256xf32> to vector<1x256xf32>
    %15 = vector.broadcast %14 : vector<1x256xf32> to vector<2x256xf32>
    %16 = arith.addf %12, %15 : vector<2x256xf32>
    %cst_12 = arith.constant 0.000000e+00 : f32
    %17 = vector.broadcast %cst_12 : f32 to vector<2x256xf32>
    %18 = arith.maximumf %16, %17 : vector<2x256xf32>
    %19 = arith.truncf %18 : vector<2x256xf32> to vector<2x256xbf16>
    %c0_13 = arith.constant 0 : index
    %c0_14 = arith.constant 0 : index
    %c0_15 = arith.constant 0 : index
    %20 = vector.load %arg5[%c0_13, %c0_14, %c0_15] : memref<2x256x128xbf16, #tpu.memory_space<vmem>>, vector<1x256x128xbf16>
    %21 = vector.shape_cast %20 : vector<1x256x128xbf16> to vector<256x128xbf16>
    %cst_16 = arith.constant dense<0.000000e+00> : vector<2x128xf32>
    %22 = tpu.matmul %19, %21, %cst_16 {dimension_numbers = #tpu.dot_dimension_numbers<[1], [0], [0], [1], [0, 0, 1, 1], [], []>} : vector<2x256xbf16>, vector<256x128xbf16>, vector<2x128xf32> -> vector<2x128xf32>
    %c0_17 = arith.constant 0 : index
    %c0_18 = arith.constant 0 : index
    %c0_19 = arith.constant 0 : index
    %23 = vector.load %arg6[%c0_17, %c0_18, %c0_19] : memref<2x1x128xf32, #tpu.memory_space<vmem>>, vector<1x1x128xf32>
    %24 = vector.shape_cast %23 : vector<1x1x128xf32> to vector<1x128xf32>
    %25 = vector.broadcast %24 : vector<1x128xf32> to vector<2x128xf32>
    %26 = arith.addf %22, %25 : vector<2x128xf32>
    %cst_20 = arith.constant 0.000000e+00 : f32
    %27 = vector.broadcast %cst_20 : f32 to vector<2x128xf32>
    %28 = arith.maximumf %26, %27 : vector<2x128xf32>
    %c0_21 = arith.constant 0 : index
    %c0_22 = arith.constant 0 : index
    %c0_23 = arith.constant 0 : index
    %29 = vector.load %arg7[%c0_21, %c0_22, %c0_23] : memref<2x1x128xbf16, #tpu.memory_space<vmem>>, vector<1x1x128xbf16>
    %30 = vector.shape_cast %29 : vector<1x1x128xbf16> to vector<1x128xbf16>
    %31 = arith.extf %30 : vector<1x128xbf16> to vector<1x128xf32>
    %32 = vector.broadcast %31 : vector<1x128xf32> to vector<2x128xf32>
    %33 = arith.mulf %28, %32 : vector<2x128xf32>
    %cst_24 = arith.constant dense<0.000000e+00> : vector<2xf32>
    %34 = vector.multi_reduction <add>, %33, %cst_24 [1] : vector<2x128xf32> to vector<2xf32>
    %35 = vector.shape_cast %34 : vector<2xf32> to vector<2x1xf32>
    %c0_25 = arith.constant 0 : index
    %c0_26 = arith.constant 0 : index
    %c0_27 = arith.constant 0 : index
    %36 = vector.load %arg8[%c0_25, %c0_26, %c0_27] : memref<2x1x1xf32, #tpu.memory_space<vmem>>, vector<1x1x1xf32>
    %37 = vector.shape_cast %36 : vector<1x1x1xf32> to vector<1x1xf32>
    %38 = vector.broadcast %37 : vector<1x1xf32> to vector<2x1xf32>
    %39 = arith.addf %35, %38 : vector<2x1xf32>
    %40 = vector.shape_cast %39 : vector<2x1xf32> to vector<2x1xf32>
    %41 = vector.broadcast %40 : vector<2x1xf32> to vector<2x128xf32>
    %c0_28 = arith.constant 0 : index
    %c0_29 = arith.constant 0 : index
    %c0_30 = arith.constant 0 : index
    %42 = vector.load %arg9[%c0_28, %c0_29, %c0_30] : memref<2x2x128xf32, #tpu.memory_space<vmem>>, vector<1x2x128xf32>
    %43 = vector.shape_cast %42 : vector<1x2x128xf32> to vector<2x128xf32>
    %44 = vector.shape_cast %41 : vector<2x128xf32> to vector<1x2x128xf32>
    tpu.vector_store %arg9[%c0_28, %c0_29, %c0_30], %44 {strides = array<i32>} : memref<2x2x128xf32, #tpu.memory_space<vmem>>, vector<1x2x128xf32>,
    %c1 = arith.constant 1 : index
    %c0_31 = arith.constant 0 : index
    %c0_32 = arith.constant 0 : index
    %45 = vector.load %arg2[%c1, %c0_31, %c0_32] : memref<2x16x256xbf16, #tpu.memory_space<vmem>>, vector<1x16x256xbf16>
    %46 = vector.shape_cast %45 : vector<1x16x256xbf16> to vector<16x256xbf16>
    %cst_33 = arith.constant dense<0.000000e+00> : vector<2x256xf32>
    %47 = tpu.matmul %1, %46, %cst_33 {dimension_numbers = #tpu.dot_dimension_numbers<[1], [0], [0], [1], [0, 0, 1, 1], [], []>} : vector<2x16xbf16>, vector<16x256xbf16>, vector<2x256xf32> -> vector<2x256xf32>
    %c1_34 = arith.constant 1 : index
    %c0_35 = arith.constant 0 : index
    %c0_36 = arith.constant 0 : index
    %48 = vector.load %arg3[%c1_34, %c0_35, %c0_36] : memref<2x1x256xbf16, #tpu.memory_space<vmem>>, vector<1x1x256xbf16>
    %49 = vector.shape_cast %48 : vector<1x1x256xbf16> to vector<1x256xbf16>
    %50 = arith.extf %49 : vector<1x256xbf16> to vector<1x256xf32>
    %51 = vector.broadcast %2 : vector<2x1xf32> to vector<2x256xf32>
    %52 = vector.broadcast %50 : vector<1x256xf32> to vector<2x256xf32>
    %53 = arith.mulf %51, %52 : vector<2x256xf32>
    %54 = arith.addf %47, %53 : vector<2x256xf32>
    %c1_37 = arith.constant 1 : index
    %c0_38 = arith.constant 0 : index
    %c0_39 = arith.constant 0 : index
    %55 = vector.load %arg4[%c1_37, %c0_38, %c0_39] : memref<2x1x256xf32, #tpu.memory_space<vmem>>, vector<1x1x256xf32>
    %56 = vector.shape_cast %55 : vector<1x1x256xf32> to vector<1x256xf32>
    %57 = vector.broadcast %56 : vector<1x256xf32> to vector<2x256xf32>
    %58 = arith.addf %54, %57 : vector<2x256xf32>
    %cst_40 = arith.constant 0.000000e+00 : f32
    %59 = vector.broadcast %cst_40 : f32 to vector<2x256xf32>
    %60 = arith.maximumf %58, %59 : vector<2x256xf32>
    %61 = arith.truncf %60 : vector<2x256xf32> to vector<2x256xbf16>
    %c1_41 = arith.constant 1 : index
    %c0_42 = arith.constant 0 : index
    %c0_43 = arith.constant 0 : index
    %62 = vector.load %arg5[%c1_41, %c0_42, %c0_43] : memref<2x256x128xbf16, #tpu.memory_space<vmem>>, vector<1x256x128xbf16>
    %63 = vector.shape_cast %62 : vector<1x256x128xbf16> to vector<256x128xbf16>
    %cst_44 = arith.constant dense<0.000000e+00> : vector<2x128xf32>
    %64 = tpu.matmul %61, %63, %cst_44 {dimension_numbers = #tpu.dot_dimension_numbers<[1], [0], [0], [1], [0, 0, 1, 1], [], []>} : vector<2x256xbf16>, vector<256x128xbf16>, vector<2x128xf32> -> vector<2x128xf32>
    %c1_45 = arith.constant 1 : index
    %c0_46 = arith.constant 0 : index
    %c0_47 = arith.constant 0 : index
    %65 = vector.load %arg6[%c1_45, %c0_46, %c0_47] : memref<2x1x128xf32, #tpu.memory_space<vmem>>, vector<1x1x128xf32>
    %66 = vector.shape_cast %65 : vector<1x1x128xf32> to vector<1x128xf32>
    %67 = vector.broadcast %66 : vector<1x128xf32> to vector<2x128xf32>
    %68 = arith.addf %64, %67 : vector<2x128xf32>
    %cst_48 = arith.constant 0.000000e+00 : f32
    %69 = vector.broadcast %cst_48 : f32 to vector<2x128xf32>
    %70 = arith.maximumf %68, %69 : vector<2x128xf32>
    %c1_49 = arith.constant 1 : index
    %c0_50 = arith.constant 0 : index
    %c0_51 = arith.constant 0 : index
    %71 = vector.load %arg7[%c1_49, %c0_50, %c0_51] : memref<2x1x128xbf16, #tpu.memory_space<vmem>>, vector<1x1x128xbf16>
    %72 = vector.shape_cast %71 : vector<1x1x128xbf16> to vector<1x128xbf16>
    %73 = arith.extf %72 : vector<1x128xbf16> to vector<1x128xf32>
    %74 = vector.broadcast %73 : vector<1x128xf32> to vector<2x128xf32>
    %75 = arith.mulf %70, %74 : vector<2x128xf32>
    %cst_52 = arith.constant dense<0.000000e+00> : vector<2xf32>
    %76 = vector.multi_reduction <add>, %75, %cst_52 [1] : vector<2x128xf32> to vector<2xf32>
    %77 = vector.shape_cast %76 : vector<2xf32> to vector<2x1xf32>
    %c1_53 = arith.constant 1 : index
    %c0_54 = arith.constant 0 : index
    %c0_55 = arith.constant 0 : index
    %78 = vector.load %arg8[%c1_53, %c0_54, %c0_55] : memref<2x1x1xf32, #tpu.memory_space<vmem>>, vector<1x1x1xf32>
    %79 = vector.shape_cast %78 : vector<1x1x1xf32> to vector<1x1xf32>
    %80 = vector.broadcast %79 : vector<1x1xf32> to vector<2x1xf32>
    %81 = arith.addf %77, %80 : vector<2x1xf32>
    %82 = vector.shape_cast %81 : vector<2x1xf32> to vector<2x1xf32>
    %83 = vector.broadcast %82 : vector<2x1xf32> to vector<2x128xf32>
    %c1_56 = arith.constant 1 : index
    %c0_57 = arith.constant 0 : index
    %c0_58 = arith.constant 0 : index
    %84 = vector.load %arg9[%c1_56, %c0_57, %c0_58] : memref<2x2x128xf32, #tpu.memory_space<vmem>>, vector<1x2x128xf32>
    %85 = vector.shape_cast %84 : vector<1x2x128xf32> to vector<2x128xf32>
    %86 = vector.shape_cast %83 : vector<2x128xf32> to vector<1x2x128xf32>
    tpu.vector_store %arg9[%c1_56, %c0_57, %c0_58], %86 {strides = array<i32>} : memref<2x2x128xf32, #tpu.memory_space<vmem>>, vector<1x2x128xf32>,
    return
  }
}

</mosaic_0001>

<llo_original>
// kernel: qnetwork_forward.1
$region0: #{qnetwork_forward.1}
  #allocation0 [shape = 'u32[]', space=smem, size = 0x4, offset = 0x4, fixed_abs, tag = 'smem constant byte address 0x4 - core index']
  #allocation1 [shape = 'u32[144,128]{1,0:T(1,128)}', space=vmem, size = 0x12000, scoped, tag = 'internal scratch']
  %s0 = inlined_call_operand.vmem [shape: f32[2,16], index: 0, kind: input, shape index: {}]
  %s1 = inlined_call_operand.vmem [shape: f32[2,1], index: 1, kind: input, shape index: {}]
  %s2 = inlined_call_operand.hbm [shape: bf16[2,16,256], index: 2, kind: input, shape index: {}]
  %s3 = inlined_call_operand.vmem [shape: bf16[2,1,256], index: 3, kind: input, shape index: {}]
  %s4 = inlined_call_operand.vmem [shape: f32[2,1,256], index: 4, kind: input, shape index: {}]
  %s5 = inlined_call_operand.hbm [shape: bf16[2,256,128], index: 5, kind: input, shape index: {}]
  %s6 = inlined_call_operand.vmem [shape: f32[2,1,128], index: 6, kind: input, shape index: {}]
  %s7 = inlined_call_operand.vmem [shape: bf16[2,1,128], index: 7, kind: input, shape index: {}]
  %s8 = inlined_call_operand.vmem [shape: f32[2,1,1], index: 8, kind: input, shape index: {}]
  %s9 = inlined_call_operand.vmem [shape: f32[2,2,128], index: 9, kind: output, shape index: {}]
  %s10 = sld [smem:[#allocation0]]
  $region54: #{qnetwork_forward.1} parent=0
    _
  %s12 = ssub.s32 1, %s10
  %s13 = scalar_select 0, %s12, %s10
  $region1: #{qnetwork_forward.1} parent=0
    #allocation2 [shape = 'u8[16384]{0}', space=vmem, size = 0x4000, scoped, tag = 'input window, operand 2, single buffered']
    #allocation3 [shape = 's32[1]{0}', space=sflag, size = 0x4, scoped, tag = 'scoped memory for qnetwork_forward.1']
    #allocation4 [shape = 'u8[131072]{0}', space=vmem, size = 0x20000, scoped, tag = 'input window, operand 5, single buffered']
    #allocation5 [shape = 's32[1]{0}', space=sflag, size = 0x4, scoped, tag = 'scoped memory for qnetwork_forward.1']
    %14 = vsyncpa [#allocation3], 0
    %15 = vsyncpa [#allocation5], 0
    // Predicated region
    $region2: #{qnetwork_forward.1} parent=1 // pred_check
      _
    $region3: #{qnetwork_forward.1} parent=1 // pred_check_branch
      %17 = sbr.rel (0) target = $region5
    $region4: #{qnetwork_forward.1} parent=1 // pred_region
      _
    $region5: #{qnetwork_forward.1} parent=1 // pred_fallthru
      _
    // Predicated region
    $region6: #{qnetwork_forward.1} parent=1 // pred_check
      _
    $region7: #{qnetwork_forward.1} parent=1 // pred_check_branch
      %19 = sbr.rel (0) target = $region9
    $region8: #{qnetwork_forward.1} parent=1 // pred_region
      _
    $region9: #{qnetwork_forward.1} parent=1 // pred_fallthru
      _
    // Predicated region
    $region10: #{qnetwork_forward.1} parent=1 // pred_check
      _
    $region11: #{qnetwork_forward.1} parent=1 // pred_check_branch
      %21 = sbr.rel (0) target = $region13
    $region12: #{qnetwork_forward.1} parent=1 // pred_region
      %s23 = ssub.s32 512, 512
      %24 = vsyncadd [#allocation3], %s23
      %s25 = sshll.u32 [#allocation2], 4
      %s26 = int_to_ptr.vmem [resolvable:$true] %s25
      %31 = dma.hbm_to_vmem [thread:$0]  %s2, 512, %s26, [#allocation3], 128, 128, 8
    $region13: #{qnetwork_forward.1} parent=1 // pred_fallthru
      _
    // Predicated region
    $region14: #{qnetwork_forward.1} parent=1 // pred_check
      _
    $region15: #{qnetwork_forward.1} parent=1 // pred_check_branch
      %33 = sbr.rel (0) target = $region17
    $region16: #{qnetwork_forward.1} parent=1 // pred_region
      _
    $region17: #{qnetwork_forward.1} parent=1 // pred_fallthru
      _
    // Predicated region
    $region18: #{qnetwork_forward.1} parent=1 // pred_check
      _
    $region19: #{qnetwork_forward.1} parent=1 // pred_check_branch
      %35 = sbr.rel (0) target = $region21
    $region20: #{qnetwork_forward.1} parent=1 // pred_region
      _
    $region21: #{qnetwork_forward.1} parent=1 // pred_fallthru
      _
    // Predicated region
    $region22: #{qnetwork_forward.1} parent=1 // pred_check
      _
    $region23: #{qnetwork_forward.1} parent=1 // pred_check_branch
      %37 = sbr.rel (0) target = $region25
    $region24: #{qnetwork_forward.1} parent=1 // pred_region
      %s39 = ssub.s32 4096, 4096
      %40 = vsyncadd [#allocation5], %s39
      %s41 = sshll.u32 [#allocation4], 4
      %s42 = int_to_ptr.vmem [resolvable:$true] %s41
      %47 = dma.hbm_to_vmem [thread:$0]  %s5, 4096, %s42, [#allocation5], 64, 64, 4
    $region25: #{qnetwork_forward.1} parent=1 // pred_fallthru
      _
    // Predicated region
    $region26: #{qnetwork_forward.1} parent=1 // pred_check
      _
    $region27: #{qnetwork_forward.1} parent=1 // pred_check_branch
      %49 = sbr.rel (0) target = $region29
    $region28: #{qnetwork_forward.1} parent=1 // pred_region
      _
    $region29: #{qnetwork_forward.1} parent=1 // pred_fallthru
      _
    // Predicated region
    $region30: #{qnetwork_forward.1} parent=1 // pred_check
      _
    $region31: #{qnetwork_forward.1} parent=1 // pred_check_branch
      %51 = sbr.rel (0) target = $region33
    $region32: #{qnetwork_forward.1} parent=1 // pred_region
      _
    $region33: #{qnetwork_forward.1} parent=1 // pred_fallthru
      _
    // Predicated region
    $region34: #{qnetwork_forward.1} parent=1 // pred_check
      _
    $region35: #{qnetwork_forward.1} parent=1 // pred_check_branch
      %53 = sbr.rel (0) target = $region37
    $region36: #{qnetwork_forward.1} parent=1 // pred_region
      _
    $region37: #{qnetwork_forward.1} parent=1 // pred_fallthru
      _
    // Predicated region
    $region38: #{qnetwork_forward.1} parent=1 // pred_check
      _
    $region39: #{qnetwork_forward.1} parent=1 // pred_check_branch
      %55 = sbr.rel (0) target = $region41
    $region40: #{qnetwork_forward.1} parent=1 // pred_region
      %56 = dma.done [#allocation3], 512
    $region41: #{qnetwork_forward.1} parent=1 // pred_fallthru
      _
    // Predicated region
    $region42: #{qnetwork_forward.1} parent=1 // pred_check
      _
    $region43: #{qnetwork_forward.1} parent=1 // pred_check_branch
      %58 = sbr.rel (0) target = $region45
    $region44: #{qnetwork_forward.1} parent=1 // pred_region
      %59 = dma.done [#allocation5], 4096
    $region45: #{qnetwork_forward.1} parent=1 // pred_fallthru
      _
    %v61 = vld [vmem:[%s0] sm:$0x3]
    %v62 = vpack.c.bf16 %v61, %v61
    %v63 = vld [vmem:[%s1] sm:$0x3]
    %v64 = vld [vmem:[#allocation2] sm:$0xff]
    %v65 = vld [vmem:[#allocation2 + $0x8] sm:$0xff]
    %v66 = vld [vmem:[%s3] sm:$0x3]
    %v67 = vunpack.c.l.bf16 %v66
    %69 = vset.pattern.permute.xlu0 0
    %70 = vperm.xlu0 %69, %v63
    %v71 = vpop.permute.xlu0 %70
    %v74 = vlaneseq
    %v75 = vshrl.u32 %v74, 7
    %v76 = vsub.s32 0, %v75
    %v77 = vrot.slane %v67, %v76
    %v78 = vlaneseq
    %v79 = vshrl.u32 %v78, 7
    %v80 = vsub.s32 2, %v79
    %v81 = vrot.slane %v67, %v80
    %v84 = vlaneseq
    %v85 = vshrl.u32 %v84, 7
    %v86 = vsub.s32 0, %v85
    %v87 = vrot.slane %v77, %v86
    %v88 = vlaneseq
    %v89 = vshrl.u32 %v88, 7
    %v90 = vsub.s32 0, %v89
    %v91 = vrot.slane %v81, %v90
    %v92 = vmul.f32 %v71, %v87
    %v93 = vmul.f32 %v71, %v91
    %v96 = vunpack.c.l.b16 %v64
    %v97 = vunpack.c.h.b16 %v64
    %v98 = vunpack.c.l.b16 %v65
    %v99 = vunpack.c.h.b16 %v65
    %v100 = vpack.c.b16 %v98, %v96
    %v101 = vpack.c.b16 %v99, %v97
    %vm104 = vcmask 130048
    %v106 = vsel %vm104, %v62, 0
    %108 = vmatprep.subr.bf16.mxu0 %v101
    %109 = vmatpush1.bf16.msra.mxu0 %v100
    %110 = vmatprep.subr.bf16.mxu0 0
    %111 = vmatpush1.bf16.msra.mxu0 0
    %112 = vmatprep.subr.bf16.mxu0 0
    %113 = vmatpush1.bf16.msra.mxu0 0
    %114 = vmatprep.subr.bf16.mxu0 0
    %115 = vmatpush1.bf16.msra.mxu0 0
    %116 = vmatprep.subr.bf16.mxu0 0
    %117 = vmatpush1.bf16.msra.mxu0 0
    %118 = vmatprep.subr.bf16.mxu0 0
    %119 = vmatpush1.bf16.msra.mxu0 0
    %120 = vmatprep.subr.bf16.mxu0 0
    %121 = vmatpush1.bf16.msra.mxu0 0
    %122 = vmatprep.subr.bf16.mxu0 0
    %123 = vmatpush1.bf16.msra.mxu0 0
    %124 = vmatprep.subr.bf16.mxu0 0
    %125 = vmatpush1.bf16.msra.mxu0 0
    %126 = vmatprep.subr.bf16.mxu0 0
    %127 = vmatpush1.bf16.msra.mxu0 0
    %128 = vmatprep.subr.bf16.mxu0 0
    %129 = vmatpush1.bf16.msra.mxu0 0
    %130 = vmatprep.subr.bf16.mxu0 0
    %131 = vmatpush1.bf16.msra.mxu0 0
    %132 = vmatprep.subr.bf16.mxu0 0
    %133 = vmatpush1.bf16.msra.mxu0 0
    %134 = vmatprep.subr.bf16.mxu0 0
    %135 = vmatpush1.bf16.msra.mxu0 0
    %136 = vmatprep.subr.bf16.mxu0 0
    %137 = vmatpush1.bf16.msra.mxu0 0
    %138 = vmatprep.subr.bf16.mxu0 0
    %139 = vmatpush1.bf16.msra.mxu0 0
    %140 = vmatprep.mubr.bf16.mxu0 0
    %141 = vmatmul.mubr.bf16.gmra.mrb[0].mxu0 %v106
    %v142 = vpop.f32.mrb[0].mxu0
    %v143 = vadd.f32 %v92, %v142
    %v144 = vpop.f32.mrb[0].mxu0
    %v145 = vadd.f32 %v93, %v144
    %v146 = vpop.f32.mrb[0].mxu0
    %v147 = vpop.f32.mrb[0].mxu0
    %148 = vdwg.mxu0
    %v149 = vld [vmem:[%s4] sm:$0x3]
    %v151 = vlaneseq
    %v152 = vshrl.u32 %v151, 7
    %v153 = vsub.s32 0, %v152
    %v154 = vrot.slane %v149, %v153
    %v155 = vlaneseq
    %v156 = vshrl.u32 %v155, 7
    %v157 = vsub.s32 1, %v156
    %v158 = vrot.slane %v149, %v157
    %v161 = vadd.f32 %v143, %v154
    %v162 = vadd.f32 %v145, %v158
    %v163 = vmax.f32 %v161, 0.0
    %v164 = vmax.f32 %v162, 0.0
    %v165 = vpack.c.bf16 %v163, %v163
    %v166 = vpack.c.bf16 %v164, %v164
    %v167 = vld [vmem:[#allocation4] sm:$0xf]
    %v168 = vld [vmem:[#allocation4 + $0x4] sm:$0xf]
    %v169 = vld [vmem:[#allocation4 + $0x8] sm:$0xf]
    %v170 = vld [vmem:[#allocation4 + $0xc] sm:$0xf]
    %v171 = vld [vmem:[#allocation4 + $0x10] sm:$0xf]
    %v172 = vld [vmem:[#allocation4 + $0x14] sm:$0xf]
    %v173 = vld [vmem:[#allocation4 + $0x18] sm:$0xf]
    %v174 = vld [vmem:[#allocation4 + $0x1c] sm:$0xf]
    %v175 = vld [vmem:[#allocation4 + $0x20] sm:$0xf]
    %v176 = vld [vmem:[#allocation4 + $0x24] sm:$0xf]
    %v177 = vld [vmem:[#allocation4 + $0x28] sm:$0xf]
    %v178 = vld [vmem:[#allocation4 + $0x2c] sm:$0xf]
    %v179 = vld [vmem:[#allocation4 + $0x30] sm:$0xf]
    %v180 = vld [vmem:[#allocation4 + $0x34] sm:$0xf]
    %v181 = vld [vmem:[#allocation4 + $0x38] sm:$0xf]
    %v182 = vld [vmem:[#allocation4 + $0x3c] sm:$0xf]
    %v183 = vld [vmem:[#allocation4 + $0x40] sm:$0xf]
    %v184 = vld [vmem:[#allocation4 + $0x44] sm:$0xf]
    %v185 = vld [vmem:[#allocation4 + $0x48] sm:$0xf]
    %v186 = vld [vmem:[#allocation4 + $0x4c] sm:$0xf]
    %v187 = vld [vmem:[#allocation4 + $0x50] sm:$0xf]
    %v188 = vld [vmem:[#allocation4 + $0x54] sm:$0xf]
    %v189 = vld [vmem:[#allocation4 + $0x58] sm:$0xf]
    %v190 = vld [vmem:[#allocation4 + $0x5c] sm:$0xf]
    %v191 = vld [vmem:[#allocation4 + $0x60] sm:$0xf]
    %v192 = vld [vmem:[#allocation4 + $0x64] sm:$0xf]
    %v193 = vld [vmem:[#allocation4 + $0x68] sm:$0xf]
    %v194 = vld [vmem:[#allocation4 + $0x6c] sm:$0xf]
    %v195 = vld [vmem:[#allocation4 + $0x70] sm:$0xf]
    %v196 = vld [vmem:[#allocation4 + $0x74] sm:$0xf]
    %v197 = vld [vmem:[#allocation4 + $0x78] sm:$0xf]
    %v198 = vld [vmem:[#allocation4 + $0x7c] sm:$0xf]
    %v199 = vld [vmem:[%s6] sm:$0x1]
    %v201 = vlaneseq
    %v202 = vshrl.u32 %v201, 7
    %v203 = vsub.s32 0, %v202
    %v204 = vrot.slane %v199, %v203
    %v238 = vunpack.c.l.b16 %v167
    %v239 = vunpack.c.l.b16 %v168
    %v240 = vunpack.c.l.b16 %v169
    %v241 = vunpack.c.l.b16 %v170
    %v242 = vunpack.c.l.b16 %v171
    %v243 = vunpack.c.l.b16 %v172
    %v244 = vunpack.c.l.b16 %v173
    %v245 = vunpack.c.l.b16 %v174
    %v246 = vunpack.c.l.b16 %v175
    %v247 = vunpack.c.l.b16 %v176
    %v248 = vunpack.c.l.b16 %v177
    %v249 = vunpack.c.l.b16 %v178
    %v250 = vunpack.c.l.b16 %v179
    %v251 = vunpack.c.l.b16 %v180
    %v252 = vunpack.c.l.b16 %v181
    %v253 = vunpack.c.l.b16 %v182
    %v254 = vunpack.c.l.b16 %v183
    %v255 = vunpack.c.l.b16 %v184
    %v256 = vunpack.c.l.b16 %v185
    %v257 = vunpack.c.l.b16 %v186
    %v258 = vunpack.c.l.b16 %v187
    %v259 = vunpack.c.l.b16 %v188
    %v260 = vunpack.c.l.b16 %v189
    %v261 = vunpack.c.l.b16 %v190
    %v262 = vunpack.c.l.b16 %v191
    %v263 = vunpack.c.l.b16 %v192
    %v264 = vunpack.c.l.b16 %v193
    %v265 = vunpack.c.l.b16 %v194
    %v266 = vunpack.c.l.b16 %v195
    %v267 = vunpack.c.l.b16 %v196
    %v268 = vunpack.c.l.b16 %v197
    %v269 = vunpack.c.l.b16 %v198
    %v270 = vpack.c.b16 %v239, %v238
    %v271 = vpack.c.b16 %v241, %v240
    %v272 = vpack.c.b16 %v243, %v242
    %v273 = vpack.c.b16 %v245, %v244
    %v274 = vpack.c.b16 %v247, %v246
    %v275 = vpack.c.b16 %v249, %v248
    %v276 = vpack.c.b16 %v251, %v250
    %v277 = vpack.c.b16 %v253, %v252
    %v278 = vpack.c.b16 %v255, %v254
    %v279 = vpack.c.b16 %v257, %v256
    %v280 = vpack.c.b16 %v259, %v258
    %v281 = vpack.c.b16 %v261, %v260
    %v282 = vpack.c.b16 %v263, %v262
    %v283 = vpack.c.b16 %v265, %v264
    %v284 = vpack.c.b16 %v267, %v266
    %v285 = vpack.c.b16 %v269, %v268
    %302 = vmatprep.subr.bf16.mxu0 0
    %303 = vmatpush1.bf16.msra.mxu0 %v270
    %304 = vmatprep.subr.bf16.mxu0 0
    %305 = vmatpush1.bf16.msra.mxu0 %v271
    %306 = vmatprep.subr.bf16.mxu0 0
    %307 = vmatpush1.bf16.msra.mxu0 %v272
    %308 = vmatprep.subr.bf16.mxu0 0
    %309 = vmatpush1.bf16.msra.mxu0 %v273
    %310 = vmatprep.subr.bf16.mxu0 0
    %311 = vmatpush1.bf16.msra.mxu0 %v274
    %312 = vmatprep.subr.bf16.mxu0 0
    %313 = vmatpush1.bf16.msra.mxu0 %v275
    %314 = vmatprep.subr.bf16.mxu0 0
    %315 = vmatpush1.bf16.msra.mxu0 %v276
    %316 = vmatprep.subr.bf16.mxu0 0
    %317 = vmatpush1.bf16.msra.mxu0 %v277
    %318 = vmatprep.subr.bf16.mxu0 0
    %319 = vmatpush1.bf16.msra.mxu0 %v278
    %320 = vmatprep.subr.bf16.mxu0 0
    %321 = vmatpush1.bf16.msra.mxu0 %v279
    %322 = vmatprep.subr.bf16.mxu0 0
    %323 = vmatpush1.bf16.msra.mxu0 %v280
    %324 = vmatprep.subr.bf16.mxu0 0
    %325 = vmatpush1.bf16.msra.mxu0 %v281
    %326 = vmatprep.subr.bf16.mxu0 0
    %327 = vmatpush1.bf16.msra.mxu0 %v282
    %328 = vmatprep.subr.bf16.mxu0 0
    %329 = vmatpush1.bf16.msra.mxu0 %v283
    %330 = vmatprep.subr.bf16.mxu0 0
    %331 = vmatpush1.bf16.msra.mxu0 %v284
    %332 = vmatprep.subr.bf16.mxu0 0
    %333 = vmatpush1.bf16.msra.mxu0 %v285
    %334 = vmatprep.mubr.bf16.mxu0 %v166
    %335 = vmatmul.mubr.bf16.gmra.mrb[0].mxu0 %v165
    %v336 = vpop.f32.mrb[0].mxu0
    %v337 = vadd.f32 %v204, %v336
    %v338 = vpop.f32.mrb[0].mxu0
    %v339 = vpop.f32.mrb[0].mxu0
    %v340 = vpop.f32.mrb[0].mxu0
    %341 = vdwg.mxu0
    %v342 = vmax.f32 %v337, 0.0
    %v343 = vld [vmem:[%s7] sm:$0x1]
    %v344 = vunpack.c.l.bf16 %v343
    %v345 = vlaneseq
    %v346 = vshrl.u32 %v345, 7
    %v347 = vsub.s32 0, %v346
    %v348 = vrot.slane %v344, %v347
    %v349 = vmul.f32 %v342, %v348
    %vm350 = vcmask 1041408
    %v351 = vsel %vm350, %v349, 0.0
    %352 = vadd.xlane.f32.xlu0 %v351
    %v353 = vpop.xlane.xlu0 %352
    %v354 = vld [vmem:[%s8] sm:$0x1]
    %v356 = vlaneseq
    %v357 = vshrl.u32 %v356, 7
    %v358 = vsub.s32 0, %v357
    %v359 = vrot.slane %v354, %v358
    %v361 = vadd.f32 %v353, %v359
    %363 = vset.pattern.permute.xlu0 0
    %364 = vperm.xlu0 %363, %v361
    %v365 = vpop.permute.xlu0 %364
    %367 = vst [vmem:[%s9] sm:$0x3] %v365
    %s368 = scalar_lea.vmem [#allocation2], 16
    %v369 = vld [vmem:[%s368] sm:$0xff]
    %v370 = vld [vmem:[%s368 + $0x8] sm:$0xff]
    %s371 = scalar_lea.vmem %s3, 2
    %v372 = vld [vmem:[%s371] sm:$0x3]
    %v373 = vunpack.c.l.bf16 %v372
    %v375 = vlaneseq
    %v376 = vshrl.u32 %v375, 7
    %v377 = vsub.s32 0, %v376
    %v378 = vrot.slane %v373, %v377
    %v379 = vlaneseq
    %v380 = vshrl.u32 %v379, 7
    %v381 = vsub.s32 2, %v380
    %v382 = vrot.slane %v373, %v381
    %v385 = vlaneseq
    %v386 = vshrl.u32 %v385, 7
    %v387 = vsub.s32 0, %v386
    %v388 = vrot.slane %v378, %v387
    %v389 = vlaneseq
    %v390 = vshrl.u32 %v389, 7
    %v391 = vsub.s32 0, %v390
    %v392 = vrot.slane %v382, %v391
    %v393 = vmul.f32 %v71, %v388
    %v394 = vmul.f32 %v71, %v392
    %v397 = vunpack.c.l.b16 %v369
    %v398 = vunpack.c.h.b16 %v369
    %v399 = vunpack.c.l.b16 %v370
    %v400 = vunpack.c.h.b16 %v370
    %v401 = vpack.c.b16 %v399, %v397
    %v402 = vpack.c.b16 %v400, %v398
    %405 = vmatprep.subr.bf16.mxu0 %v402
    %406 = vmatpush1.bf16.msra.mxu0 %v401
    %407 = vmatprep.subr.bf16.mxu0 0
    %408 = vmatpush1.bf16.msra.mxu0 0
    %409 = vmatprep.subr.bf16.mxu0 0
    %410 = vmatpush1.bf16.msra.mxu0 0
    %411 = vmatprep.subr.bf16.mxu0 0
    %412 = vmatpush1.bf16.msra.mxu0 0
    %413 = vmatprep.subr.bf16.mxu0 0
    %414 = vmatpush1.bf16.msra.mxu0 0
    %415 = vmatprep.subr.bf16.mxu0 0
    %416 = vmatpush1.bf16.msra.mxu0 0
    %417 = vmatprep.subr.bf16.mxu0 0
    %418 = vmatpush1.bf16.msra.mxu0 0
    %419 = vmatprep.subr.bf16.mxu0 0
    %420 = vmatpush1.bf16.msra.mxu0 0
    %421 = vmatprep.subr.bf16.mxu0 0
    %422 = vmatpush1.bf16.msra.mxu0 0
    %423 = vmatprep.subr.bf16.mxu0 0
    %424 = vmatpush1.bf16.msra.mxu0 0
    %425 = vmatprep.subr.bf16.mxu0 0
    %426 = vmatpush1.bf16.msra.mxu0 0
    %427 = vmatprep.subr.bf16.mxu0 0
    %428 = vmatpush1.bf16.msra.mxu0 0
    %429 = vmatprep.subr.bf16.mxu0 0
    %430 = vmatpush1.bf16.msra.mxu0 0
    %431 = vmatprep.subr.bf16.mxu0 0
    %432 = vmatpush1.bf16.msra.mxu0 0
    %433 = vmatprep.subr.bf16.mxu0 0
    %434 = vmatpush1.bf16.msra.mxu0 0
    %435 = vmatprep.subr.bf16.mxu0 0
    %436 = vmatpush1.bf16.msra.mxu0 0
    %437 = vmatprep.mubr.bf16.mxu0 0
    %438 = vmatmul.mubr.bf16.gmra.mrb[0].mxu0 %v106
    %v439 = vpop.f32.mrb[0].mxu0
    %v440 = vadd.f32 %v393, %v439
    %v441 = vpop.f32.mrb[0].mxu0
    %v442 = vadd.f32 %v394, %v441
    %v443 = vpop.f32.mrb[0].mxu0
    %v444 = vpop.f32.mrb[0].mxu0
    %445 = vdwg.mxu0
    %s446 = scalar_lea.vmem %s4, 2
    %v447 = vld [vmem:[%s446] sm:$0x3]
    %v449 = vlaneseq
    %v450 = vshrl.u32 %v449, 7
    %v451 = vsub.s32 0, %v450
    %v452 = vrot.slane %v447, %v451
    %v453 = vlaneseq
    %v454 = vshrl.u32 %v453, 7
    %v455 = vsub.s32 1, %v454
    %v456 = vrot.slane %v447, %v455
    %v459 = vadd.f32 %v440, %v452
    %v460 = vadd.f32 %v442, %v456
    %v461 = vmax.f32 %v459, 0.0
    %v462 = vmax.f32 %v460, 0.0
    %v463 = vpack.c.bf16 %v461, %v461
    %v464 = vpack.c.bf16 %v462, %v462
    %s465 = scalar_lea.vmem [#allocation4], 128
    %v466 = vld [vmem:[%s465] sm:$0xf]
    %v467 = vld [vmem:[%s465 + $0x4] sm:$0xf]
    %v468 = vld [vmem:[%s465 + $0x8] sm:$0xf]
    %v469 = vld [vmem:[%s465 + $0xc] sm:$0xf]
    %v470 = vld [vmem:[%s465 + $0x10] sm:$0xf]
    %v471 = vld [vmem:[%s465 + $0x14] sm:$0xf]
    %v472 = vld [vmem:[%s465 + $0x18] sm:$0xf]
    %v473 = vld [vmem:[%s465 + $0x1c] sm:$0xf]
    %v474 = vld [vmem:[%s465 + $0x20] sm:$0xf]
    %v475 = vld [vmem:[%s465 + $0x24] sm:$0xf]
    %v476 = vld [vmem:[%s465 + $0x28] sm:$0xf]
    %v477 = vld [vmem:[%s465 + $0x2c] sm:$0xf]
    %v478 = vld [vmem:[%s465 + $0x30] sm:$0xf]
    %v479 = vld [vmem:[%s465 + $0x34] sm:$0xf]
    %v480 = vld [vmem:[%s465 + $0x38] sm:$0xf]
    %v481 = vld [vmem:[%s465 + $0x3c] sm:$0xf]
    %v482 = vld [vmem:[%s465 + $0x40] sm:$0xf]
    %v483 = vld [vmem:[%s465 + $0x44] sm:$0xf]
    %v484 = vld [vmem:[%s465 + $0x48] sm:$0xf]
    %v485 = vld [vmem:[%s465 + $0x4c] sm:$0xf]
    %v486 = vld [vmem:[%s465 + $0x50] sm:$0xf]
    %v487 = vld [vmem:[%s465 + $0x54] sm:$0xf]
    %v488 = vld [vmem:[%s465 + $0x58] sm:$0xf]
    %v489 = vld [vmem:[%s465 + $0x5c] sm:$0xf]
    %v490 = vld [vmem:[%s465 + $0x60] sm:$0xf]
    %v491 = vld [vmem:[%s465 + $0x64] sm:$0xf]
    %v492 = vld [vmem:[%s465 + $0x68] sm:$0xf]
    %v493 = vld [vmem:[%s465 + $0x6c] sm:$0xf]
    %v494 = vld [vmem:[%s465 + $0x70] sm:$0xf]
    %v495 = vld [vmem:[%s465 + $0x74] sm:$0xf]
    %v496 = vld [vmem:[%s465 + $0x78] sm:$0xf]
    %v497 = vld [vmem:[%s465 + $0x7c] sm:$0xf]
    %s498 = scalar_lea.vmem %s6, 1
    %v499 = vld [vmem:[%s498] sm:$0x1]
    %v501 = vlaneseq
    %v502 = vshrl.u32 %v501, 7
    %v503 = vsub.s32 0, %v502
    %v504 = vrot.slane %v499, %v503
    %v538 = vunpack.c.l.b16 %v466
    %v539 = vunpack.c.l.b16 %v467
    %v540 = vunpack.c.l.b16 %v468
    %v541 = vunpack.c.l.b16 %v469
    %v542 = vunpack.c.l.b16 %v470
    %v543 = vunpack.c.l.b16 %v471
    %v544 = vunpack.c.l.b16 %v472
    %v545 = vunpack.c.l.b16 %v473
    %v546 = vunpack.c.l.b16 %v474
    %v547 = vunpack.c.l.b16 %v475
    %v548 = vunpack.c.l.b16 %v476
    %v549 = vunpack.c.l.b16 %v477
    %v550 = vunpack.c.l.b16 %v478
    %v551 = vunpack.c.l.b16 %v479
    %v552 = vunpack.c.l.b16 %v480
    %v553 = vunpack.c.l.b16 %v481
    %v554 = vunpack.c.l.b16 %v482
    %v555 = vunpack.c.l.b16 %v483
    %v556 = vunpack.c.l.b16 %v484
    %v557 = vunpack.c.l.b16 %v485
    %v558 = vunpack.c.l.b16 %v486
    %v559 = vunpack.c.l.b16 %v487
    %v560 = vunpack.c.l.b16 %v488
    %v561 = vunpack.c.l.b16 %v489
    %v562 = vunpack.c.l.b16 %v490
    %v563 = vunpack.c.l.b16 %v491
    %v564 = vunpack.c.l.b16 %v492
    %v565 = vunpack.c.l.b16 %v493
    %v566 = vunpack.c.l.b16 %v494
    %v567 = vunpack.c.l.b16 %v495
    %v568 = vunpack.c.l.b16 %v496
    %v569 = vunpack.c.l.b16 %v497
    %v570 = vpack.c.b16 %v539, %v538
    %v571 = vpack.c.b16 %v541, %v540
    %v572 = vpack.c.b16 %v543, %v542
    %v573 = vpack.c.b16 %v545, %v544
    %v574 = vpack.c.b16 %v547, %v546
    %v575 = vpack.c.b16 %v549, %v548
    %v576 = vpack.c.b16 %v551, %v550
    %v577 = vpack.c.b16 %v553, %v552
    %v578 = vpack.c.b16 %v555, %v554
    %v579 = vpack.c.b16 %v557, %v556
    %v580 = vpack.c.b16 %v559, %v558
    %v581 = vpack.c.b16 %v561, %v560
    %v582 = vpack.c.b16 %v563, %v562
    %v583 = vpack.c.b16 %v565, %v564
    %v584 = vpack.c.b16 %v567, %v566
    %v585 = vpack.c.b16 %v569, %v568
    %602 = vmatprep.subr.bf16.mxu0 0
    %603 = vmatpush1.bf16.msra.mxu0 %v570
    %604 = vmatprep.subr.bf16.mxu0 0
    %605 = vmatpush1.bf16.msra.mxu0 %v571
    %606 = vmatprep.subr.bf16.mxu0 0
    %607 = vmatpush1.bf16.msra.mxu0 %v572
    %608 = vmatprep.subr.bf16.mxu0 0
    %609 = vmatpush1.bf16.msra.mxu0 %v573
    %610 = vmatprep.subr.bf16.mxu0 0
    %611 = vmatpush1.bf16.msra.mxu0 %v574
    %612 = vmatprep.subr.bf16.mxu0 0
    %613 = vmatpush1.bf16.msra.mxu0 %v575
    %614 = vmatprep.subr.bf16.mxu0 0
    %615 = vmatpush1.bf16.msra.mxu0 %v576
    %616 = vmatprep.subr.bf16.mxu0 0
    %617 = vmatpush1.bf16.msra.mxu0 %v577
    %618 = vmatprep.subr.bf16.mxu0 0
    %619 = vmatpush1.bf16.msra.mxu0 %v578
    %620 = vmatprep.subr.bf16.mxu0 0
    %621 = vmatpush1.bf16.msra.mxu0 %v579
    %622 = vmatprep.subr.bf16.mxu0 0
    %623 = vmatpush1.bf16.msra.mxu0 %v580
    %624 = vmatprep.subr.bf16.mxu0 0
    %625 = vmatpush1.bf16.msra.mxu0 %v581
    %626 = vmatprep.subr.bf16.mxu0 0
    %627 = vmatpush1.bf16.msra.mxu0 %v582
    %628 = vmatprep.subr.bf16.mxu0 0
    %629 = vmatpush1.bf16.msra.mxu0 %v583
    %630 = vmatprep.subr.bf16.mxu0 0
    %631 = vmatpush1.bf16.msra.mxu0 %v584
    %632 = vmatprep.subr.bf16.mxu0 0
    %633 = vmatpush1.bf16.msra.mxu0 %v585
    %634 = vmatprep.mubr.bf16.mxu0 %v464
    %635 = vmatmul.mubr.bf16.gmra.mrb[0].mxu0 %v463
    %v636 = vpop.f32.mrb[0].mxu0
    %v637 = vadd.f32 %v504, %v636
    %v638 = vpop.f32.mrb[0].mxu0
    %v639 = vpop.f32.mrb[0].mxu0
    %v640 = vpop.f32.mrb[0].mxu0
    %641 = vdwg.mxu0
    %v642 = vmax.f32 %v637, 0.0
    %s643 = scalar_lea.vmem %s7, 1
    %v644 = vld [vmem:[%s643] sm:$0x1]
    %v645 = vunpack.c.l.bf16 %v644
    %v646 = vlaneseq
    %v647 = vshrl.u32 %v646, 7
    %v648 = vsub.s32 0, %v647
    %v649 = vrot.slane %v645, %v648
    %v650 = vmul.f32 %v642, %v649
    %v651 = vsel %vm350, %v650, 0.0
    %652 = vadd.xlane.f32.xlu0 %v651
    %v653 = vpop.xlane.xlu0 %652
    %s654 = scalar_lea.vmem %s8, 1
    %v655 = vld [vmem:[%s654] sm:$0x1]
    %v657 = vlaneseq
    %v658 = vshrl.u32 %v657, 7
    %v659 = vsub.s32 0, %v658
    %v660 = vrot.slane %v655, %v659
    %v662 = vadd.f32 %v653, %v660
    %664 = vset.pattern.permute.xlu0 0
    %665 = vperm.xlu0 %664, %v662
    %v666 = vpop.permute.xlu0 %665
    %s668 = scalar_lea.vmem %s9, 2
    %669 = vst [vmem:[%s668] sm:$0x3] %v666
    // Predicated region
    $region46: #{qnetwork_forward.1} parent=1 // pred_check
      _
    $region47: #{qnetwork_forward.1} parent=1 // pred_check_branch
      %671 = sbr.rel (0) target = $region49
    $region48: #{qnetwork_forward.1} parent=1 // pred_region
      _
    $region49: #{qnetwork_forward.1} parent=1 // pred_fallthru
      _
    // Predicated region
    $region50: #{qnetwork_forward.1} parent=1 // pred_check
      _
    $region51: #{qnetwork_forward.1} parent=1 // pred_check_branch
      %673 = sbr.rel (0) target = $region53
    $region52: #{qnetwork_forward.1} parent=1 // pred_region
      _
    $region53: #{qnetwork_forward.1} parent=1 // pred_fallthru
      _
    %674 = vsyncpa [#allocation3], 1
    %675 = vsyncpa [#allocation5], 1

</llo_original>
